<compile_context>
chip_gen: v7x
topology: tpu7x:2x2x1
jax: 0.10.0
libtpu: 0.0.40
codegen_flags: <defaults>
</compile_context>

<pallas_src>
import numpy as np
import jax
import jax.numpy as jnp
from jax import lax
from jax.experimental import pallas as pl
from jax.experimental.pallas import tpu as pltpu


# ---------------------------------------------------------------------------
# Fused kernel: body conv -> head conv -> fused classifiers -> bilinear resize
#               + att_map(body) + att_map(pre_logits), all per-sample in VMEM.
# ---------------------------------------------------------------------------
def _fused_network_kernel(x_ref, wb_ref, bb_ref, wh_ref, bh_ref,
                          wc_ref, bc_ref, bt_ref,
                          sem_ref, xb_ref, xpl_ref, xo_ref):
    x = x_ref[0].astype(jnp.float32)                                   # (Cin, hw)

    # 1x1 convs, channels-first so the spatial dim (hw) lives on the lane axis.
    x_b = jnp.dot(wb_ref[...], x,
                  preferred_element_type=jnp.float32) + bb_ref[...]    # (Cb, hw)
    x_pl = jnp.dot(wh_ref[...], x_b,
                   preferred_element_type=jnp.float32) + bh_ref[...]   # (Ch, hw)
    x_o = jnp.dot(wc_ref[...], x_pl,
                  preferred_element_type=jnp.float32) + bc_ref[...]    # (Ctot, hw)

    xo_ref[0] = x_o.astype(xo_ref.dtype)

    # Bilinear upsample (align_corners=False), pre-composed into one matmul:
    # (Ctot, hw) @ (hw, H*W) -> lane-dense (>=128-wide) output, unmasked stores.
    sem_ref[0] = jnp.dot(x_o, bt_ref[...],
                         preferred_element_type=jnp.float32).astype(sem_ref.dtype)

    # att_map: a = sum_c x^2 ; a /= ||a||_F (per sample) ; x *= a
    # (no epsilon, matching the PyTorch reference exactly)
    a_b = jnp.sum(x_b * x_b, axis=0, keepdims=True)                    # (1, hw)
    xb_ref[0] = (x_b * (a_b * lax.rsqrt(jnp.sum(a_b * a_b)))).astype(xb_ref.dtype)

    a_p = jnp.sum(x_pl * x_pl, axis=0, keepdims=True)                  # (1, hw)
    xpl_ref[0] = (x_pl * (a_p * lax.rsqrt(jnp.sum(a_p * a_p)))).astype(xpl_ref.dtype)


# ---------------------------------------------------------------------------
# Host-side (numpy) interpolation matrices for F.interpolate(bilinear,
# align_corners=False); composed into a single Kronecker matrix per forward.
# ---------------------------------------------------------------------------
def _interp_matrix(out_size, in_size):
    scale = in_size / out_size
    dst = np.arange(out_size, dtype=np.float64)
    src = np.maximum((dst + 0.5) * scale - 0.5, 0.0)
    i0 = np.minimum(np.floor(src).astype(np.int64), in_size - 1)
    i1 = np.minimum(i0 + 1, in_size - 1)
    frac = src - i0
    m = np.zeros((out_size, in_size), dtype=np.float64)
    np.add.at(m, (np.arange(out_size), i0), 1.0 - frac)
    np.add.at(m, (np.arange(out_size), i1), frac)
    return m.astype(np.float32)


def _bilinear_kron_t(H, W, h, w):
    # out_flat = kron(Ah, Aw) @ in_flat  ->  per-sample matmul with B^T on the right.
    return jnp.asarray(np.kron(_interp_matrix(H, h), _interp_matrix(W, w)).T)  # (h*w, H*W)


# ---------------------------------------------------------------------------
# Module wrapper (deterministic synthetic parameters, no checkpoint load)
# ---------------------------------------------------------------------------
class IncrementalSegmentationModule:
    def __init__(self, key, in_channels, body_channels, head_channels, classes):
        assert isinstance(classes, list)
        self.classes = classes
        self.in_channels = in_channels
        self.body_channels = body_channels
        self.head_channels = head_channels
        self.tot_classes = sum(classes)

        k = jax.random.split(key, 6 + 2 * len(classes))
        scale = 0.1
        w_body = scale * jax.random.normal(k[0], (in_channels, body_channels), jnp.float32)
        b_body = scale * jax.random.normal(k[1], (body_channels,), jnp.float32)
        w_head = scale * jax.random.normal(k[2], (body_channels, head_channels), jnp.float32)
        b_head = scale * jax.random.normal(k[3], (head_channels,), jnp.float32)
        w_cls = [scale * jax.random.normal(k[4 + 2 * i], (head_channels, c), jnp.float32)
                 for i, c in enumerate(classes)]
        b_cls = [scale * jax.random.normal(k[5 + 2 * i], (c,), jnp.float32)
                 for i, c in enumerate(classes)]

        # Channels-first (Cout, Cin) weights + column biases; all classifier
        # heads concatenated along Cout so they are one matmul in the kernel.
        self.wb_t = jnp.transpose(w_body)                                    # (Cb, Cin)
        self.bb = b_body.reshape(-1, 1)                                      # (Cb, 1)
        self.wh_t = jnp.transpose(w_head)                                    # (Ch, Cb)
        self.bh = b_head.reshape(-1, 1)                                      # (Ch, 1)
        self.wc_t = jnp.concatenate([jnp.transpose(w) for w in w_cls], axis=0)  # (Ctot, Ch)
        self.bc = jnp.concatenate(b_cls, axis=0).reshape(-1, 1)                 # (Ctot, 1)
        # TODO(synk): requires_grad / fix_bn / init_new_classifier are training-time
        # bookkeeping with no forward-pass effect; not represented here.

    def forward(self, x, x_b_old=None, x_pl_old=None, ret_intermediate=False):
        n, c_in, H, W = x.shape
        h, w = H // 2, W // 2                       # synthetic body has stride 2
        hw = h * w
        # NCHW -> (N, Cin, h*w) needs only a strided slice + reshape (no transpose).
        x_s = x[:, :, ::2, ::2].reshape(n, c_in, hw)

        bt = _bilinear_kron_t(H, W, h, w)           # (hw, H*W)

        cb, ch, cc = self.body_channels, self.head_channels, self.tot_classes
        dt = x.dtype

        sem, x_b, x_pl, x_o = pl.pallas_call(
            _fused_network_kernel,
            out_shape=(
                jax.ShapeDtypeStruct((n, cc, H * W), dt),
                jax.ShapeDtypeStruct((n, cb, hw), dt),
                jax.ShapeDtypeStruct((n, ch, hw), dt),
                jax.ShapeDtypeStruct((n, cc, hw), dt),
            ),
            grid_spec=pltpu.PrefetchScalarGridSpec(
                num_scalar_prefetch=0,
                grid=(n,),
                in_specs=[
                    pl.BlockSpec((1, c_in, hw), lambda i: (i, 0, 0)),
                    pl.BlockSpec((cb, c_in), lambda i: (0, 0)),
                    pl.BlockSpec((cb, 1), lambda i: (0, 0)),
                    pl.BlockSpec((ch, cb), lambda i: (0, 0)),
                    pl.BlockSpec((ch, 1), lambda i: (0, 0)),
                    pl.BlockSpec((cc, ch), lambda i: (0, 0)),
                    pl.BlockSpec((cc, 1), lambda i: (0, 0)),
                    pl.BlockSpec((hw, H * W), lambda i: (0, 0)),
                ],
                out_specs=(
                    pl.BlockSpec((1, cc, H * W), lambda i: (i, 0, 0)),
                    pl.BlockSpec((1, cb, hw), lambda i: (i, 0, 0)),
                    pl.BlockSpec((1, ch, hw), lambda i: (i, 0, 0)),
                    pl.BlockSpec((1, cc, hw), lambda i: (i, 0, 0)),
                ),
            ),
            compiler_params=pltpu.CompilerParams(
                dimension_semantics=("parallel",)),
        )(x_s, self.wb_t, self.bb, self.wh_t, self.bh, self.wc_t, self.bc, bt)

        sem_logits = sem.reshape(n, cc, H, W)
        return sem_logits, {"body": x_b.reshape(n, cb, h, w),
                            "pre_logits": x_pl.reshape(n, ch, h, w),
                            "sem": x_o.reshape(n, cc, h, w)}


# ---------------------------------------------------------------------------
# Pure-JAX reference (same math, no Pallas) for a correctness check.
# ---------------------------------------------------------------------------
def _reference_forward(module, x):
    n, c_in, H, W = x.shape
    h, w = H // 2, W // 2
    xs = x[:, :, ::2, ::2].reshape(n, c_in, h * w).astype(jnp.float32)
    xb = jnp.einsum('oc,nck->nok', module.wb_t, xs) + module.bb[None]
    xpl = jnp.einsum('oc,nck->nok', module.wh_t, xb) + module.bh[None]
    xo = jnp.einsum('oc,nck->nok', module.wc_t, xpl) + module.bc[None]
    bt = _bilinear_kron_t(H, W, h, w)
    sem = jnp.einsum('nok,kl->nol', xo, bt).reshape(n, -1, H, W)

    def att(t):
        a = jnp.sum(t * t, axis=1, keepdims=True)
        nrm = jnp.sqrt(jnp.sum(a * a, axis=(1, 2), keepdims=True))
        return t * (a / nrm)

    return (sem, att(xb).reshape(n, -1, h, w),
            att(xpl).reshape(n, -1, h, w), xo.reshape(n, -1, h, w))


if __name__ == "__main__":
    key = jax.random.PRNGKey(0)
    k_param, k_x = jax.random.split(key)

    N, C_in, H, W = 2, 4, 16, 16
    body_channels, head_channels = 8, 16
    classes = [3, 2]

    module = IncrementalSegmentationModule(k_param, C_in, body_channels,
                                           head_channels, classes)
    x = jax.random.normal(k_x, (N, C_in, H, W), jnp.float32)

    sem_logits, extras = module.forward(x)
    jax.block_until_ready(sem_logits)
    jax.block_until_ready(extras["body"])
    jax.block_until_ready(extras["pre_logits"])
    jax.block_until_ready(extras["sem"])

    assert sem_logits.shape == (N, sum(classes), H, W)
    assert extras["body"].shape == (N, body_channels, H // 2, W // 2)
    assert extras["pre_logits"].shape == (N, head_channels, H // 2, W // 2)
    assert extras["sem"].shape == (N, sum(classes), H // 2, W // 2)

    # Numerical check against the pure-JAX reference.
    ref_sem, ref_b, ref_pl, ref_o = _reference_forward(module, x)
    np.testing.assert_allclose(np.asarray(sem_logits), np.asarray(ref_sem),
                               rtol=1e-3, atol=1e-3)
    np.testing.assert_allclose(np.asarray(extras["body"]), np.asarray(ref_b),
                               rtol=1e-3, atol=1e-3)
    np.testing.assert_allclose(np.asarray(extras["pre_logits"]), np.asarray(ref_pl),
                               rtol=1e-3, atol=1e-3)
    np.testing.assert_allclose(np.asarray(extras["sem"]), np.asarray(ref_o),
                               rtol=1e-3, atol=1e-3)

    print("KERNEL_OK")
</pallas_src>

<mosaic_0001>
module attributes {stable_mosaic.version = 11 : i64} {
  func.func @_fused_network_kernel(%arg0: i32, %arg1: memref<1x4x64xf32, #tpu.memory_space<vmem>>, %arg2: memref<8x4xf32, #tpu.memory_space<vmem>>, %arg3: memref<8x1xf32, #tpu.memory_space<vmem>>, %arg4: memref<16x8xf32, #tpu.memory_space<vmem>>, %arg5: memref<16x1xf32, #tpu.memory_space<vmem>>, %arg6: memref<5x16xf32, #tpu.memory_space<vmem>>, %arg7: memref<5x1xf32, #tpu.memory_space<vmem>>, %arg8: memref<64x256xf32, #tpu.memory_space<vmem>>, %arg9: memref<1x5x256xf32, #tpu.memory_space<vmem>>, %arg10: memref<1x8x64xf32, #tpu.memory_space<vmem>>, %arg11: memref<1x16x64xf32, #tpu.memory_space<vmem>>, %arg12: memref<1x5x64xf32, #tpu.memory_space<vmem>>) attributes {dimension_semantics = [#tpu.dimension_semantics<parallel>], iteration_bounds = array<i64: 2>, scalar_prefetch = 0 : i64, scratch_operands = 0 : i64, tpu.core_type = #tpu.core_type<tc>, window_params = [{transform_indices = @transform_0, window_bounds = array<i64: 1, 4, 64>}, {pipeline_mode = #tpu.pipeline_mode<synchronous>, transform_indices = @transform_1, window_bounds = array<i64: 8, 4>}, {pipeline_mode = #tpu.pipeline_mode<synchronous>, transform_indices = @transform_2, window_bounds = array<i64: 8, 1>}, {pipeline_mode = #tpu.pipeline_mode<synchronous>, transform_indices = @transform_3, window_bounds = array<i64: 16, 8>}, {pipeline_mode = #tpu.pipeline_mode<synchronous>, transform_indices = @transform_4, window_bounds = array<i64: 16, 1>}, {pipeline_mode = #tpu.pipeline_mode<synchronous>, transform_indices = @transform_5, window_bounds = array<i64: 5, 16>}, {pipeline_mode = #tpu.pipeline_mode<synchronous>, transform_indices = @transform_6, window_bounds = array<i64: 5, 1>}, {pipeline_mode = #tpu.pipeline_mode<synchronous>, transform_indices = @transform_7, window_bounds = array<i64: 64, 256>}, {transform_indices = @transform_8, window_bounds = array<i64: 1, 5, 256>}, {transform_indices = @transform_9, window_bounds = array<i64: 1, 8, 64>}, {transform_indices = @transform_10, window_bounds = array<i64: 1, 16, 64>}, {transform_indices = @transform_11, window_bounds = array<i64: 1, 5, 64>}]} {
    %c0 = arith.constant 0 : index
    %c0_0 = arith.constant 0 : index
    %c0_1 = arith.constant 0 : index
    %0 = vector.load %arg1[%c0, %c0_0, %c0_1] : memref<1x4x64xf32, #tpu.memory_space<vmem>>, vector<1x4x64xf32>
    %1 = vector.shape_cast %0 : vector<1x4x64xf32> to vector<4x64xf32>
    %c0_2 = arith.constant 0 : index
    %c0_3 = arith.constant 0 : index
    %2 = vector.load %arg2[%c0_2, %c0_3] : memref<8x4xf32, #tpu.memory_space<vmem>>, vector<8x4xf32>
    %cst = arith.constant dense<0.000000e+00> : vector<8x64xf32>
    %3 = tpu.matmul %2, %1, %cst {dimension_numbers = #tpu.dot_dimension_numbers<[1], [0], [0], [1], [0, 0, 1, 1], [], []>} : vector<8x4xf32>, vector<4x64xf32>, vector<8x64xf32> -> vector<8x64xf32>
    %c0_4 = arith.constant 0 : index
    %c0_5 = arith.constant 0 : index
    %4 = vector.load %arg3[%c0_4, %c0_5] : memref<8x1xf32, #tpu.memory_space<vmem>>, vector<8x1xf32>
    %5 = vector.broadcast %4 : vector<8x1xf32> to vector<8x64xf32>
    %6 = arith.addf %3, %5 : vector<8x64xf32>
    %c0_6 = arith.constant 0 : index
    %c0_7 = arith.constant 0 : index
    %7 = vector.load %arg4[%c0_6, %c0_7] : memref<16x8xf32, #tpu.memory_space<vmem>>, vector<16x8xf32>
    %cst_8 = arith.constant dense<0.000000e+00> : vector<16x64xf32>
    %8 = tpu.matmul %7, %6, %cst_8 {dimension_numbers = #tpu.dot_dimension_numbers<[1], [0], [0], [1], [0, 0, 1, 1], [], []>} : vector<16x8xf32>, vector<8x64xf32>, vector<16x64xf32> -> vector<16x64xf32>
    %c0_9 = arith.constant 0 : index
    %c0_10 = arith.constant 0 : index
    %9 = vector.load %arg5[%c0_9, %c0_10] : memref<16x1xf32, #tpu.memory_space<vmem>>, vector<16x1xf32>
    %10 = vector.broadcast %9 : vector<16x1xf32> to vector<16x64xf32>
    %11 = arith.addf %8, %10 : vector<16x64xf32>
    %c0_11 = arith.constant 0 : index
    %c0_12 = arith.constant 0 : index
    %12 = vector.load %arg6[%c0_11, %c0_12] : memref<5x16xf32, #tpu.memory_space<vmem>>, vector<5x16xf32>
    %cst_13 = arith.constant dense<0.000000e+00> : vector<5x64xf32>
    %13 = tpu.matmul %12, %11, %cst_13 {dimension_numbers = #tpu.dot_dimension_numbers<[1], [0], [0], [1], [0, 0, 1, 1], [], []>} : vector<5x16xf32>, vector<16x64xf32>, vector<5x64xf32> -> vector<5x64xf32>
    %c0_14 = arith.constant 0 : index
    %c0_15 = arith.constant 0 : index
    %14 = vector.load %arg7[%c0_14, %c0_15] : memref<5x1xf32, #tpu.memory_space<vmem>>, vector<5x1xf32>
    %15 = vector.broadcast %14 : vector<5x1xf32> to vector<5x64xf32>
    %16 = arith.addf %13, %15 : vector<5x64xf32>
    %c0_16 = arith.constant 0 : index
    %c0_17 = arith.constant 0 : index
    %c0_18 = arith.constant 0 : index
    %17 = vector.load %arg12[%c0_16, %c0_17, %c0_18] : memref<1x5x64xf32, #tpu.memory_space<vmem>>, vector<1x5x64xf32>
    %18 = vector.shape_cast %17 : vector<1x5x64xf32> to vector<5x64xf32>
    %19 = vector.shape_cast %16 : vector<5x64xf32> to vector<1x5x64xf32>
    tpu.vector_store %arg12[%c0_16, %c0_17, %c0_18], %19 {strides = array<i32>} : memref<1x5x64xf32, #tpu.memory_space<vmem>>, vector<1x5x64xf32>,
    %c0_19 = arith.constant 0 : index
    %c0_20 = arith.constant 0 : index
    %20 = vector.load %arg8[%c0_19, %c0_20] : memref<64x256xf32, #tpu.memory_space<vmem>>, vector<64x256xf32>
    %cst_21 = arith.constant dense<0.000000e+00> : vector<5x256xf32>
    %21 = tpu.matmul %16, %20, %cst_21 {dimension_numbers = #tpu.dot_dimension_numbers<[1], [0], [0], [1], [0, 0, 1, 1], [], []>} : vector<5x64xf32>, vector<64x256xf32>, vector<5x256xf32> -> vector<5x256xf32>
    %c0_22 = arith.constant 0 : index
    %c0_23 = arith.constant 0 : index
    %c0_24 = arith.constant 0 : index
    %22 = vector.load %arg9[%c0_22, %c0_23, %c0_24] : memref<1x5x256xf32, #tpu.memory_space<vmem>>, vector<1x5x256xf32>
    %23 = vector.shape_cast %22 : vector<1x5x256xf32> to vector<5x256xf32>
    %24 = vector.shape_cast %21 : vector<5x256xf32> to vector<1x5x256xf32>
    tpu.vector_store %arg9[%c0_22, %c0_23, %c0_24], %24 {strides = array<i32>} : memref<1x5x256xf32, #tpu.memory_space<vmem>>, vector<1x5x256xf32>,
    %25 = arith.mulf %6, %6 : vector<8x64xf32>
    %cst_25 = arith.constant dense<0.000000e+00> : vector<64xf32>
    %26 = vector.multi_reduction <add>, %25, %cst_25 [0] : vector<8x64xf32> to vector<64xf32>
    %27 = vector.shape_cast %26 : vector<64xf32> to vector<1x64xf32>
    %28 = arith.mulf %27, %27 : vector<1x64xf32>
    %29 = vector.shape_cast %28 : vector<1x64xf32> to vector<1x1x64xf32>
    %cst_26 = arith.constant dense<0.000000e+00> : vector<1xf32>
    %30 = vector.multi_reduction <add>, %29, %cst_26 [1, 2] : vector<1x1x64xf32> to vector<1xf32>
    %31 = vector.shape_cast %30 : vector<1xf32> to vector<1x1x1xf32>
    %32 = vector.extract %31[0, 0, 0] : f32 from vector<1x1x1xf32>
    %33 = math.rsqrt %32 : f32
    %34 = vector.broadcast %33 : f32 to vector<1x64xf32>
    %35 = arith.mulf %27, %34 : vector<1x64xf32>
    %36 = vector.broadcast %35 : vector<1x64xf32> to vector<8x64xf32>
    %37 = arith.mulf %6, %36 : vector<8x64xf32>
    %c0_27 = arith.constant 0 : index
    %c0_28 = arith.constant 0 : index
    %c0_29 = arith.constant 0 : index
    %38 = vector.load %arg10[%c0_27, %c0_28, %c0_29] : memref<1x8x64xf32, #tpu.memory_space<vmem>>, vector<1x8x64xf32>
    %39 = vector.shape_cast %38 : vector<1x8x64xf32> to vector<8x64xf32>
    %40 = vector.shape_cast %37 : vector<8x64xf32> to vector<1x8x64xf32>
    tpu.vector_store %arg10[%c0_27, %c0_28, %c0_29], %40 {strides = array<i32>} : memref<1x8x64xf32, #tpu.memory_space<vmem>>, vector<1x8x64xf32>,
    %41 = arith.mulf %11, %11 : vector<16x64xf32>
    %cst_30 = arith.constant dense<0.000000e+00> : vector<64xf32>
    %42 = vector.multi_reduction <add>, %41, %cst_30 [0] : vector<16x64xf32> to vector<64xf32>
    %43 = vector.shape_cast %42 : vector<64xf32> to vector<1x64xf32>
    %44 = arith.mulf %43, %43 : vector<1x64xf32>
    %45 = vector.shape_cast %44 : vector<1x64xf32> to vector<1x1x64xf32>
    %cst_31 = arith.constant dense<0.000000e+00> : vector<1xf32>
    %46 = vector.multi_reduction <add>, %45, %cst_31 [1, 2] : vector<1x1x64xf32> to vector<1xf32>
    %47 = vector.shape_cast %46 : vector<1xf32> to vector<1x1x1xf32>
    %48 = vector.extract %47[0, 0, 0] : f32 from vector<1x1x1xf32>
    %49 = math.rsqrt %48 : f32
    %50 = vector.broadcast %49 : f32 to vector<1x64xf32>
    %51 = arith.mulf %43, %50 : vector<1x64xf32>
    %52 = vector.broadcast %51 : vector<1x64xf32> to vector<16x64xf32>
    %53 = arith.mulf %11, %52 : vector<16x64xf32>
    %c0_32 = arith.constant 0 : index
    %c0_33 = arith.constant 0 : index
    %c0_34 = arith.constant 0 : index
    %54 = vector.load %arg11[%c0_32, %c0_33, %c0_34] : memref<1x16x64xf32, #tpu.memory_space<vmem>>, vector<1x16x64xf32>
    %55 = vector.shape_cast %54 : vector<1x16x64xf32> to vector<16x64xf32>
    %56 = vector.shape_cast %53 : vector<16x64xf32> to vector<1x16x64xf32>
    tpu.vector_store %arg11[%c0_32, %c0_33, %c0_34], %56 {strides = array<i32>} : memref<1x16x64xf32, #tpu.memory_space<vmem>>, vector<1x16x64xf32>,
    return
  }
  func.func @transform_0(%arg0: i32) -> (i32, i32, i32) {
    %c0_i32 = arith.constant 0 : i32
    %c0_i32_0 = arith.constant 0 : i32
    %c0_i32_1 = arith.constant 0 : i32
    return %arg0, %c0_i32, %c0_i32_0 : i32, i32, i32
  }
  func.func @transform_1(%arg0: i32) -> (i32, i32) {
    %c0_i32 = arith.constant 0 : i32
    %c0_i32_0 = arith.constant 0 : i32
    %c0_i32_1 = arith.constant 0 : i32
    return %c0_i32, %c0_i32_0 : i32, i32
  }
  func.func @transform_2(%arg0: i32) -> (i32, i32) {
    %c0_i32 = arith.constant 0 : i32
    %c0_i32_0 = arith.constant 0 : i32
    %c0_i32_1 = arith.constant 0 : i32
    return %c0_i32, %c0_i32_0 : i32, i32
  }
  func.func @transform_3(%arg0: i32) -> (i32, i32) {
    %c0_i32 = arith.constant 0 : i32
    %c0_i32_0 = arith.constant 0 : i32
    %c0_i32_1 = arith.constant 0 : i32
    return %c0_i32, %c0_i32_0 : i32, i32
  }
  func.func @transform_4(%arg0: i32) -> (i32, i32) {
    %c0_i32 = arith.constant 0 : i32
    %c0_i32_0 = arith.constant 0 : i32
    %c0_i32_1 = arith.constant 0 : i32
    return %c0_i32, %c0_i32_0 : i32, i32
  }
  func.func @transform_5(%arg0: i32) -> (i32, i32) {
    %c0_i32 = arith.constant 0 : i32
    %c0_i32_0 = arith.constant 0 : i32
    %c0_i32_1 = arith.constant 0 : i32
    return %c0_i32, %c0_i32_0 : i32, i32
  }
  func.func @transform_6(%arg0: i32) -> (i32, i32) {
    %c0_i32 = arith.constant 0 : i32
    %c0_i32_0 = arith.constant 0 : i32
    %c0_i32_1 = arith.constant 0 : i32
    return %c0_i32, %c0_i32_0 : i32, i32
  }
  func.func @transform_7(%arg0: i32) -> (i32, i32) {
    %c0_i32 = arith.constant 0 : i32
    %c0_i32_0 = arith.constant 0 : i32
    %c0_i32_1 = arith.constant 0 : i32
    return %c0_i32, %c0_i32_0 : i32, i32
  }
  func.func @transform_8(%arg0: i32) -> (i32, i32, i32) {
    %c0_i32 = arith.constant 0 : i32
    %c0_i32_0 = arith.constant 0 : i32
    %c0_i32_1 = arith.constant 0 : i32
    return %arg0, %c0_i32, %c0_i32_0 : i32, i32, i32
  }
  func.func @transform_9(%arg0: i32) -> (i32, i32, i32) {
    %c0_i32 = arith.constant 0 : i32
    %c0_i32_0 = arith.constant 0 : i32
    %c0_i32_1 = arith.constant 0 : i32
    return %arg0, %c0_i32, %c0_i32_0 : i32, i32, i32
  }
  func.func @transform_10(%arg0: i32) -> (i32, i32, i32) {
    %c0_i32 = arith.constant 0 : i32
    %c0_i32_0 = arith.constant 0 : i32
    %c0_i32_1 = arith.constant 0 : i32
    return %arg0, %c0_i32, %c0_i32_0 : i32, i32, i32
  }
  func.func @transform_11(%arg0: i32) -> (i32, i32, i32) {
    %c0_i32 = arith.constant 0 : i32
    %c0_i32_0 = arith.constant 0 : i32
    %c0_i32_1 = arith.constant 0 : i32
    return %arg0, %c0_i32, %c0_i32_0 : i32, i32, i32
  }
}

</mosaic_0001>

<llo_original>
// kernel: tpu_custom_call.1
$region0: #{tpu_custom_call.1}
  #allocation0 [shape = 'u32[]', space=smem, size = 0x4, offset = 0x4, fixed_abs, tag = 'smem constant byte address 0x4 - core index']
  #allocation1 [shape = 'u32[144,128]{1,0:T(1,128)}', space=vmem, size = 0x12000, scoped, tag = 'internal scratch']
  %s0 = inlined_call_operand.vmem [shape: f32[2,4,64], index: 0, kind: input, shape index: {}]
  %s1 = inlined_call_operand.vmem [shape: f32[8,4], index: 1, kind: input, shape index: {}]
  %s2 = inlined_call_operand.vmem [shape: f32[8,1], index: 2, kind: input, shape index: {}]
  %s3 = inlined_call_operand.vmem [shape: f32[16,8], index: 3, kind: input, shape index: {}]
  %s4 = inlined_call_operand.vmem [shape: f32[16,1], index: 4, kind: input, shape index: {}]
  %s5 = inlined_call_operand.vmem [shape: f32[5,16], index: 5, kind: input, shape index: {}]
  %s6 = inlined_call_operand.vmem [shape: f32[5,1], index: 6, kind: input, shape index: {}]
  %s7 = inlined_call_operand.hbm [shape: f32[64,256], index: 7, kind: input, shape index: {}]
  %s8 = inlined_call_operand.vmem [shape: f32[2,5,256], index: 8, kind: output, shape index: {0}]
  %s9 = inlined_call_operand.hbm [shape: f32[2,8,64], index: 9, kind: output, shape index: {1}]
  %s10 = inlined_call_operand.hbm [shape: f32[2,16,64], index: 10, kind: output, shape index: {2}]
  %s11 = inlined_call_operand.vmem [shape: f32[2,5,64], index: 11, kind: output, shape index: {3}]
  %12 = xla_tuple %s8, %s9, %s10, %s11
  %s13 = sld [smem:[#allocation0]]
  $region93: #{tpu_custom_call.1} parent=0
    _
  %s15 = ssub.s32 1, %s13
  %s16 = scalar_select 0, %s15, %s13
  $region1: #{tpu_custom_call.1} parent=0
    #allocation2 [shape = 'u8[65536]{0}', space=vmem, size = 0x10000, scoped, tag = 'input window, operand 7, single buffered']
    #allocation3 [shape = 's32[2]{0}', space=sflag, size = 0x8, scoped, tag = 'scoped memory for tpu_custom_call.1']
    #allocation4 [shape = 's32[2]{0}', space=sflag, size = 0x8, scoped, tag = 'scoped memory for tpu_custom_call.1']
    #allocation5 [shape = 'u8[8192]{0}', space=vmem, size = 0x2000, scoped, tag = 'output window, operand 1']
    #allocation6 [shape = 'u8[16384]{0}', space=vmem, size = 0x4000, scoped, tag = 'output window, operand 2']
    #allocation7 [shape = 's32[2]{0}', space=sflag, size = 0x8, scoped, tag = 'scoped memory for tpu_custom_call.1']
    %17 = vsyncpa [#allocation3], 0
    %18 = vsyncpa [#allocation4], 0
    %s19 = scalar_lea.sflag [#allocation4], 1
    %20 = vsyncpa %s19, 0
    %21 = vsyncpa [#allocation7], 0
    %s22 = scalar_lea.sflag [#allocation7], 1
    %23 = vsyncpa %s22, 0
    loop: start=0, step=1, limit=4
    $region2: #{tpu_custom_call.1} parent=1 // loop_pre_header
      _
    $region3: #{tpu_custom_call.1} parent=1 // loop_header
      %s25 = sphi 0, %s29
      %p26 = scmp.ge.s32.totalorder %s25, 4
      %s35 = sphi 0, %s37
      %s38 = sphi 0, %s35
      %s39 = sphi 0, %s38
      %s55 = sphi 0, %s39
      %s59 = sphi 0, %s59
      %s61 = sphi 0, %s59
      %s62 = sphi 0, %s61
      %s76 = sphi 0, %s62
      %s80 = sphi 0, %s80
      %s82 = sphi 0, %s80
      %s83 = sphi 0, %s82
      %s97 = sphi 0, %s83
      %s101 = sphi 0, %s101
      %s103 = sphi 0, %s101
      %s104 = sphi 0, %s103
      %s118 = sphi 0, %s104
      %s122 = sphi 0, %s122
      %s124 = sphi 0, %s122
      %s125 = sphi 0, %s124
      %s139 = sphi 0, %s125
      %s143 = sphi 0, %s143
      %s145 = sphi 0, %s143
      %s146 = sphi 0, %s145
      %s160 = sphi 0, %s146
      %s164 = sphi 0, %s164
      %s166 = sphi 0, %s164
      %s167 = sphi 0, %s166
      %s181 = sphi 0, %s167
      %s185 = sphi 0, %s185
      %s187 = sphi 0, %s185
      %s188 = sphi 0, %s187
      %s202 = sphi 0, %s188
      %s208 = sphi 0, %s210
      %s211 = sphi 0, %s208
      %s212 = sphi 0, %s211
      %s228 = sphi 0, %s212
      %s234 = sphi 0, %s236
      %s237 = sphi 0, %s234
      %s238 = sphi 0, %s237
      %s254 = sphi 0, %s238
      %s260 = sphi 0, %s262
      %s263 = sphi 0, %s260
      %s264 = sphi 0, %s263
      %s280 = sphi 0, %s264
      %s286 = sphi 0, %s288
      %s289 = sphi 0, %s286
      %s290 = sphi 0, %s289
      %s306 = sphi 0, %s290
    $region4: #{tpu_custom_call.1} parent=1 // loop_header_branch
      %28 = sbr.rel (%p26) target = $region8
    $region5: #{tpu_custom_call.1} parent=1 // loop_body
      %s30 = ssub.s32 %s25, 1
      %s31 = ssub.s32 %s25, 2
      %s32 = sadd.s32 %s25, 1
      %s33 = ssub.s32 %s25, %s32
      %p34 = scmp.eq.s32.totalorder %s33, 0
      %s36 = sadd.s32 %s35, 1
      %s37 = scalar_select %p34, %s35, %s36
      %p40 = pneg %p34
      %p41 = scmp.eq.s32.totalorder %s25, 1
      %p42 = por %p40, %p41
      %p43 = scmp.ne.s32.totalorder %s35, %s38
      %p44 = scmp.eq.s32.totalorder %s25, 0
      %p45 = por %p43, %p44
      %p46 = scmp.ne.s32.totalorder %s35, %s38
      %p47 = scmp.eq.s32.totalorder %s30, 1
      %p48 = por %p46, %p47
      %p49 = scmp.ne.s32.totalorder %s38, %s39
      %p50 = scmp.eq.s32.totalorder %s30, 0
      %p51 = por %p49, %p50
      %p52 = scmp.ne.s32.totalorder %s38, %s39
      %p53 = scmp.eq.s32.totalorder %s31, 1
      %p54 = por %p52, %p53
      %p56 = scmp.ne.s32.totalorder %s39, %s55
      %p57 = scmp.eq.s32.totalorder %s31, 0
      %p58 = por %p56, %p57
      %s60 = sadd.s32 %s59, 1
      %p63 = scmp.eq.s32.totalorder %s25, 1
      %p64 = scmp.ne.s32.totalorder %s59, %s61
      %p65 = scmp.eq.s32.totalorder %s25, 0
      %p66 = por %p64, %p65
      %p67 = scmp.ne.s32.totalorder %s59, %s61
      %p68 = scmp.eq.s32.totalorder %s30, 1
      %p69 = por %p67, %p68
      %p70 = scmp.ne.s32.totalorder %s61, %s62
      %p71 = scmp.eq.s32.totalorder %s30, 0
      %p72 = por %p70, %p71
      %p73 = scmp.ne.s32.totalorder %s61, %s62
      %p74 = scmp.eq.s32.totalorder %s31, 1
      %p75 = por %p73, %p74
      %p77 = scmp.ne.s32.totalorder %s62, %s76
      %p78 = scmp.eq.s32.totalorder %s31, 0
      %p79 = por %p77, %p78
      %s81 = sadd.s32 %s80, 1
      %p84 = scmp.eq.s32.totalorder %s25, 1
      %p85 = scmp.ne.s32.totalorder %s80, %s82
      %p86 = scmp.eq.s32.totalorder %s25, 0
      %p87 = por %p85, %p86
      %p88 = scmp.ne.s32.totalorder %s80, %s82
      %p89 = scmp.eq.s32.totalorder %s30, 1
      %p90 = por %p88, %p89
      %p91 = scmp.ne.s32.totalorder %s82, %s83
      %p92 = scmp.eq.s32.totalorder %s30, 0
      %p93 = por %p91, %p92
      %p94 = scmp.ne.s32.totalorder %s82, %s83
      %p95 = scmp.eq.s32.totalorder %s31, 1
      %p96 = por %p94, %p95
      %p98 = scmp.ne.s32.totalorder %s83, %s97
      %p99 = scmp.eq.s32.totalorder %s31, 0
      %p100 = por %p98, %p99
      %s102 = sadd.s32 %s101, 1
      %p105 = scmp.eq.s32.totalorder %s25, 1
      %p106 = scmp.ne.s32.totalorder %s101, %s103
      %p107 = scmp.eq.s32.totalorder %s25, 0
      %p108 = por %p106, %p107
      %p109 = scmp.ne.s32.totalorder %s101, %s103
      %p110 = scmp.eq.s32.totalorder %s30, 1
      %p111 = por %p109, %p110
      %p112 = scmp.ne.s32.totalorder %s103, %s104
      %p113 = scmp.eq.s32.totalorder %s30, 0
      %p114 = por %p112, %p113
      %p115 = scmp.ne.s32.totalorder %s103, %s104
      %p116 = scmp.eq.s32.totalorder %s31, 1
      %p117 = por %p115, %p116
      %p119 = scmp.ne.s32.totalorder %s104, %s118
      %p120 = scmp.eq.s32.totalorder %s31, 0
      %p121 = por %p119, %p120
      %s123 = sadd.s32 %s122, 1
      %p126 = scmp.eq.s32.totalorder %s25, 1
      %p127 = scmp.ne.s32.totalorder %s122, %s124
      %p128 = scmp.eq.s32.totalorder %s25, 0
      %p129 = por %p127, %p128
      %p130 = scmp.ne.s32.totalorder %s122, %s124
      %p131 = scmp.eq.s32.totalorder %s30, 1
      %p132 = por %p130, %p131
      %p133 = scmp.ne.s32.totalorder %s124, %s125
      %p134 = scmp.eq.s32.totalorder %s30, 0
      %p135 = por %p133, %p134
      %p136 = scmp.ne.s32.totalorder %s124, %s125
      %p137 = scmp.eq.s32.totalorder %s31, 1
      %p138 = por %p136, %p137
      %p140 = scmp.ne.s32.totalorder %s125, %s139
      %p141 = scmp.eq.s32.totalorder %s31, 0
      %p142 = por %p140, %p141
      %s144 = sadd.s32 %s143, 1
      %p147 = scmp.eq.s32.totalorder %s25, 1
      %p148 = scmp.ne.s32.totalorder %s143, %s145
      %p149 = scmp.eq.s32.totalorder %s25, 0
      %p150 = por %p148, %p149
      %p151 = scmp.ne.s32.totalorder %s143, %s145
      %p152 = scmp.eq.s32.totalorder %s30, 1
      %p153 = por %p151, %p152
      %p154 = scmp.ne.s32.totalorder %s145, %s146
      %p155 = scmp.eq.s32.totalorder %s30, 0
      %p156 = por %p154, %p155
      %p157 = scmp.ne.s32.totalorder %s145, %s146
      %p158 = scmp.eq.s32.totalorder %s31, 1
      %p159 = por %p157, %p158
      %p161 = scmp.ne.s32.totalorder %s146, %s160
      %p162 = scmp.eq.s32.totalorder %s31, 0
      %p163 = por %p161, %p162
      %s165 = sadd.s32 %s164, 1
      %p168 = scmp.eq.s32.totalorder %s25, 1
      %p169 = scmp.ne.s32.totalorder %s164, %s166
      %p170 = scmp.eq.s32.totalorder %s25, 0
      %p171 = por %p169, %p170
      %p172 = scmp.ne.s32.totalorder %s164, %s166
      %p173 = scmp.eq.s32.totalorder %s30, 1
      %p174 = por %p172, %p173
      %p175 = scmp.ne.s32.totalorder %s166, %s167
      %p176 = scmp.eq.s32.totalorder %s30, 0
      %p177 = por %p175, %p176
      %p178 = scmp.ne.s32.totalorder %s166, %s167
      %p179 = scmp.eq.s32.totalorder %s31, 1
      %p180 = por %p178, %p179
      %p182 = scmp.ne.s32.totalorder %s167, %s181
      %p183 = scmp.eq.s32.totalorder %s31, 0
      %p184 = por %p182, %p183
      %s186 = sadd.s32 %s185, 1
      %p189 = scmp.eq.s32.totalorder %s25, 1
      %p190 = scmp.ne.s32.totalorder %s185, %s187
      %p191 = scmp.eq.s32.totalorder %s25, 0
      %p192 = por %p190, %p191
      %p193 = scmp.ne.s32.totalorder %s185, %s187
      %p194 = scmp.eq.s32.totalorder %s30, 1
      %p195 = por %p193, %p194
      %p196 = scmp.ne.s32.totalorder %s187, %s188
      %p197 = scmp.eq.s32.totalorder %s30, 0
      %p198 = por %p196, %p197
      %p199 = scmp.ne.s32.totalorder %s187, %s188
      %p200 = scmp.eq.s32.totalorder %s31, 1
      %p201 = por %p199, %p200
      %p203 = scmp.ne.s32.totalorder %s188, %s202
      %p204 = scmp.eq.s32.totalorder %s31, 0
      %p205 = por %p203, %p204
      %s206 = ssub.s32 %s25, %s32
      %p207 = scmp.eq.s32.totalorder %s206, 0
      %s209 = sadd.s32 %s208, 1
      %s210 = scalar_select %p207, %s208, %s209
      %p213 = pneg %p207
      %p214 = scmp.eq.s32.totalorder %s25, 1
      %p215 = por %p213, %p214
      %p216 = scmp.ne.s32.totalorder %s208, %s211
      %p217 = scmp.eq.s32.totalorder %s25, 0
      %p218 = por %p216, %p217
      %p219 = scmp.ne.s32.totalorder %s208, %s211
      %p220 = scmp.eq.s32.totalorder %s30, 1
      %p221 = por %p219, %p220
      %p222 = scmp.ne.s32.totalorder %s211, %s212
      %p223 = scmp.eq.s32.totalorder %s30, 0
      %p224 = por %p222, %p223
      %p225 = scmp.ne.s32.totalorder %s211, %s212
      %p226 = scmp.eq.s32.totalorder %s31, 1
      %p227 = por %p225, %p226
      %p229 = scmp.ne.s32.totalorder %s212, %s228
      %p230 = scmp.eq.s32.totalorder %s31, 0
      %p231 = por %p229, %p230
      %s232 = ssub.s32 %s25, %s32
      %p233 = scmp.eq.s32.totalorder %s232, 0
      %s235 = sadd.s32 %s234, 1
      %s236 = scalar_select %p233, %s234, %s235
      %p239 = pneg %p233
      %p240 = scmp.eq.s32.totalorder %s25, 1
      %p241 = por %p239, %p240
      %p242 = scmp.ne.s32.totalorder %s234, %s237
      %p243 = scmp.eq.s32.totalorder %s25, 0
      %p244 = por %p242, %p243
      %p245 = scmp.ne.s32.totalorder %s234, %s237
      %p246 = scmp.eq.s32.totalorder %s30, 1
      %p247 = por %p245, %p246
      %p248 = scmp.ne.s32.totalorder %s237, %s238
      %p249 = scmp.eq.s32.totalorder %s30, 0
      %p250 = por %p248, %p249
      %p251 = scmp.ne.s32.totalorder %s237, %s238
      %p252 = scmp.eq.s32.totalorder %s31, 1
      %p253 = por %p251, %p252
      %p255 = scmp.ne.s32.totalorder %s238, %s254
      %p256 = scmp.eq.s32.totalorder %s31, 0
      %p257 = por %p255, %p256
      %s258 = ssub.s32 %s25, %s32
      %p259 = scmp.eq.s32.totalorder %s258, 0
      %s261 = sadd.s32 %s260, 1
      %s262 = scalar_select %p259, %s260, %s261
      %p265 = pneg %p259
      %p266 = scmp.eq.s32.totalorder %s25, 1
      %p267 = por %p265, %p266
      %p268 = scmp.ne.s32.totalorder %s260, %s263
      %p269 = scmp.eq.s32.totalorder %s25, 0
      %p270 = por %p268, %p269
      %p271 = scmp.ne.s32.totalorder %s260, %s263
      %p272 = scmp.eq.s32.totalorder %s30, 1
      %p273 = por %p271, %p272
      %p274 = scmp.ne.s32.totalorder %s263, %s264
      %p275 = scmp.eq.s32.totalorder %s30, 0
      %p276 = por %p274, %p275
      %p277 = scmp.ne.s32.totalorder %s263, %s264
      %p278 = scmp.eq.s32.totalorder %s31, 1
      %p279 = por %p277, %p278
      %p281 = scmp.ne.s32.totalorder %s264, %s280
      %p282 = scmp.eq.s32.totalorder %s31, 0
      %p283 = por %p281, %p282
      %s284 = ssub.s32 %s25, %s32
      %p285 = scmp.eq.s32.totalorder %s284, 0
      %s287 = sadd.s32 %s286, 1
      %s288 = scalar_select %p285, %s286, %s287
      %p291 = pneg %p285
      %p292 = scmp.eq.s32.totalorder %s25, 1
      %p293 = por %p291, %p292
      %p294 = scmp.ne.s32.totalorder %s286, %s289
      %p295 = scmp.eq.s32.totalorder %s25, 0
      %p296 = por %p294, %p295
      %p297 = scmp.ne.s32.totalorder %s286, %s289
      %p298 = scmp.eq.s32.totalorder %s30, 1
      %p299 = por %p297, %p298
      %p300 = scmp.ne.s32.totalorder %s289, %s290
      %p301 = scmp.eq.s32.totalorder %s30, 0
      %p302 = por %p300, %p301
      %p303 = scmp.ne.s32.totalorder %s289, %s290
      %p304 = scmp.eq.s32.totalorder %s31, 1
      %p305 = por %p303, %p304
      %p307 = scmp.ne.s32.totalorder %s290, %s306
      %p308 = scmp.eq.s32.totalorder %s31, 0
      %p309 = por %p307, %p308
      %p310 = scmp.le.s32.totalorder 1, %s25
      %p311 = scmp.lt.s32.totalorder %s25, 3
      %p312 = pnand %p310, %p311
      %p313 = pneg %p312
      // Predicated region
      $region9: #{tpu_custom_call.1} parent=5 // pred_check
        _
      $region10: #{tpu_custom_call.1} parent=5 // pred_check_branch
        %315 = sbr.rel (%p312) target = $region12
      $region11: #{tpu_custom_call.1} parent=5 // pred_region
        %s316 = ssub.s32 %s25, 1
        // Predicated region
        $region13: #{tpu_custom_call.1} parent=11 // pred_check
          %p317 = pneg %p72
        $region14: #{tpu_custom_call.1} parent=11 // pred_check_branch
          %319 = sbr.rel (%p317) target = $region16
        $region15: #{tpu_custom_call.1} parent=11 // pred_region
          _
        $region16: #{tpu_custom_call.1} parent=11 // pred_fallthru
          _
        // Predicated region
        $region17: #{tpu_custom_call.1} parent=11 // pred_check
          %p320 = pneg %p93
        $region18: #{tpu_custom_call.1} parent=11 // pred_check_branch
          %322 = sbr.rel (%p320) target = $region20
        $region19: #{tpu_custom_call.1} parent=11 // pred_region
          _
        $region20: #{tpu_custom_call.1} parent=11 // pred_fallthru
          _
        // Predicated region
        $region21: #{tpu_custom_call.1} parent=11 // pred_check
          %p323 = pneg %p114
        $region22: #{tpu_custom_call.1} parent=11 // pred_check_branch
          %325 = sbr.rel (%p323) target = $region24
        $region23: #{tpu_custom_call.1} parent=11 // pred_region
          _
        $region24: #{tpu_custom_call.1} parent=11 // pred_fallthru
          _
        // Predicated region
        $region25: #{tpu_custom_call.1} parent=11 // pred_check
          %p326 = pneg %p135
        $region26: #{tpu_custom_call.1} parent=11 // pred_check_branch
          %328 = sbr.rel (%p326) target = $region28
        $region27: #{tpu_custom_call.1} parent=11 // pred_region
          _
        $region28: #{tpu_custom_call.1} parent=11 // pred_fallthru
          _
        // Predicated region
        $region29: #{tpu_custom_call.1} parent=11 // pred_check
          %p329 = pneg %p156
        $region30: #{tpu_custom_call.1} parent=11 // pred_check_branch
          %331 = sbr.rel (%p329) target = $region32
        $region31: #{tpu_custom_call.1} parent=11 // pred_region
          _
        $region32: #{tpu_custom_call.1} parent=11 // pred_fallthru
          _
        // Predicated region
        $region33: #{tpu_custom_call.1} parent=11 // pred_check
          %p332 = pneg %p177
        $region34: #{tpu_custom_call.1} parent=11 // pred_check_branch
          %334 = sbr.rel (%p332) target = $region36
        $region35: #{tpu_custom_call.1} parent=11 // pred_region
          _
        $region36: #{tpu_custom_call.1} parent=11 // pred_fallthru
          _
        // Predicated region
        $region37: #{tpu_custom_call.1} parent=11 // pred_check
          %p335 = pneg %p198
        $region38: #{tpu_custom_call.1} parent=11 // pred_check_branch
          %337 = sbr.rel (%p335) target = $region40
        $region39: #{tpu_custom_call.1} parent=11 // pred_region
          %s339 = ssub.s32 2048, 2048
          %340 = vsyncadd [#allocation3], %s339
          %s341 = sshll.u32 [#allocation2], 4
          %s342 = int_to_ptr.vmem [resolvable:$true] %s341
          %347 = dma.hbm_to_vmem [thread:$0]  %s7, 2048, %s342, [#allocation3], 256, 256, 16
        $region40: #{tpu_custom_call.1} parent=11 // pred_fallthru
          _
      $region12: #{tpu_custom_call.1} parent=5 // pred_fallthru
        _
      %p348 = scmp.lt.s32.totalorder %s25, 2
      // Predicated region
      $region41: #{tpu_custom_call.1} parent=5 // pred_check
        %p349 = pneg %p348
      $region42: #{tpu_custom_call.1} parent=5 // pred_check_branch
        %351 = sbr.rel (%p349) target = $region44
      $region43: #{tpu_custom_call.1} parent=5 // pred_region
        // Predicated region
        $region45: #{tpu_custom_call.1} parent=43 // pred_check
          %p352 = pneg %p45
        $region46: #{tpu_custom_call.1} parent=43 // pred_check_branch
          %354 = sbr.rel (%p352) target = $region48
        $region47: #{tpu_custom_call.1} parent=43 // pred_region
          %p355 = scmp.lt.s32.totalorder %s25, 1
          %s356 = scalar_select %p355, %s25, 1
          %s357 = smul.addr %s356, 4
          %s358 = scalar_lea.vmem %s0, %s357
        $region48: #{tpu_custom_call.1} parent=43 // pred_fallthru
          _
      $region44: #{tpu_custom_call.1} parent=5 // pred_fallthru
        _
      %p359 = scmp.le.s32.totalorder 1, %s25
      %p360 = scmp.lt.s32.totalorder %s25, 3
      %p361 = pnand %p359, %p360
      %p362 = pneg %p361
      // Predicated region
      $region49: #{tpu_custom_call.1} parent=5 // pred_check
        _
      $region50: #{tpu_custom_call.1} parent=5 // pred_check_branch
        %364 = sbr.rel (%p361) target = $region52
      $region51: #{tpu_custom_call.1} parent=5 // pred_region
        %s365 = ssub.s32 %s25, 1
        // Predicated region
        $region53: #{tpu_custom_call.1} parent=51 // pred_check
          %p366 = pneg %p198
        $region54: #{tpu_custom_call.1} parent=51 // pred_check_branch
          %368 = sbr.rel (%p366) target = $region56
        $region55: #{tpu_custom_call.1} parent=51 // pred_region
          %369 = dma.done [#allocation3], 2048
        $region56: #{tpu_custom_call.1} parent=51 // pred_fallthru
          _
        %p370 = scmp.lt.s32.totalorder %s30, 1
        %s371 = scalar_select %p370, %s30, 1
        %s372 = smul.addr %s371, 4
        %s373 = scalar_lea.vmem %s0, %s372
        %p374 = pneg %p51
        %p375 = pneg %p48
        %p376 = pneg %p72
        %p377 = pneg %p69
        %p378 = pneg %p93
        %p379 = pneg %p90
        %p380 = pneg %p114
        %p381 = pneg %p111
        %p382 = pneg %p135
        %p383 = pneg %p132
        %p384 = pneg %p156
        %p385 = pneg %p153
        %p386 = pneg %p177
        %p387 = pneg %p174
        %p388 = pneg %p198
        %p389 = pneg %p195
        %p390 = pneg %p224
        %p391 = pneg %p221
        %p392 = scmp.lt.s32.totalorder %s30, 1
        %s393 = scalar_select %p392, %s30, 1
        %s394 = smul.addr %s393, 2
        %s395 = smul.addr %s394, 8
        %s396 = scalar_lea.vmem %s8, %s395
        %p397 = pneg %p250
        %p398 = pneg %p247
        %s399 = sand.u32 %s237, 1
        %s400 = scalar_lea.sflag [#allocation4], %s399
        %s401 = sand.u32 %s237, 1
        %s402 = smul.addr %s401, 8
        %s403 = scalar_lea.vmem [#allocation5], %s402
        %p404 = pneg %p276
        %p405 = pneg %p273
        %s406 = sand.u32 %s263, 1
        %s407 = scalar_lea.sflag [#allocation7], %s406
        %s408 = sand.u32 %s263, 1
        %s409 = smul.addr %s408, 16
        %s410 = scalar_lea.vmem [#allocation6], %s409
        %p411 = pneg %p302
        %p412 = pneg %p299
        %p413 = scmp.lt.s32.totalorder %s30, 1
        %s414 = scalar_select %p413, %s30, 1
        %s415 = smul.addr %s414, 8
        %s416 = scalar_lea.vmem %s11, %s415
        %p417 = scmp.lt.s32.totalorder %s30, 1
        %s418 = scalar_select %p417, %s30, 1
        %s419 = smul.addr %s418, 4
        %s420 = scalar_lea.vmem %s0, %s419
        %p421 = scmp.lt.s32.totalorder %s30, 1
        %s422 = scalar_select %p421, %s30, 1
        %s423 = smul.addr %s422, 2
        %s424 = smul.addr %s423, 8
        %s425 = scalar_lea.vmem %s8, %s424
        %p426 = scmp.lt.s32.totalorder %s30, 1
        %s427 = scalar_select %p426, %s30, 1
        %s428 = smul.addr %s427, 8
        %s429 = scalar_lea.vmem %s11, %s428
        %v430 = vld [vmem:[%s420] sm:$0xf]
        %v431 = vld [vmem:[%s1] sm:$0xff]
        %v432 = vld [vmem:[%s2] sm:$0xff]
        %434 = vset.pattern.permute.xlu0 0
        %435 = vperm.xlu0 %434, %v432
        %v436 = vpop.permute.xlu0 %435
        %vm438 = vcmask 31744
        %v440 = vsel %vm438, %v431, 0
        %vm442 = vcmask 1043456
        %v444 = vsel %vm442, %v430, 0
        %446 = vmatprep.subr.mxu0 0.0
        %447 = vmatpush1.msra.mxu0 %v444
        %448 = vmatprep.subr.mxu0 0.0
        %449 = vmatpush1.msra.mxu0 0.0
        %450 = vmatprep.subr.mxu0 0.0
        %451 = vmatpush1.msra.mxu0 0.0
        %452 = vmatprep.subr.mxu0 0.0
        %453 = vmatpush1.msra.mxu0 0.0
        %454 = vmatprep.subr.mxu0 0.0
        %455 = vmatpush1.msra.mxu0 0.0
        %456 = vmatprep.subr.mxu0 0.0
        %457 = vmatpush1.msra.mxu0 0.0
        %458 = vmatprep.subr.mxu0 0.0
        %459 = vmatpush1.msra.mxu0 0.0
        %460 = vmatprep.subr.mxu0 0.0
        %461 = vmatpush1.msra.mxu0 0.0
        %462 = vmatprep.subr.mxu0 0.0
        %463 = vmatpush1.msra.mxu0 0.0
        %464 = vmatprep.subr.mxu0 0.0
        %465 = vmatpush1.msra.mxu0 0.0
        %466 = vmatprep.subr.mxu0 0.0
        %467 = vmatpush1.msra.mxu0 0.0
        %468 = vmatprep.subr.mxu0 0.0
        %469 = vmatpush1.msra.mxu0 0.0
        %470 = vmatprep.subr.mxu0 0.0
        %471 = vmatpush1.msra.mxu0 0.0
        %472 = vmatprep.subr.mxu0 0.0
        %473 = vmatpush1.msra.mxu0 0.0
        %474 = vmatprep.subr.mxu0 0.0
        %475 = vmatpush1.msra.mxu0 0.0
        %476 = vmatprep.subr.mxu0 0.0
        %477 = vmatpush1.msra.mxu0 0.0
        %478 = vmatprep.subr.mxu0 0.0
        %479 = vmatpush1.msra.mxu0 0.0
        %480 = vmatprep.subr.mxu0 0.0
        %481 = vmatpush1.msra.mxu0 0.0
        %482 = vmatprep.subr.mxu0 0.0
        %483 = vmatpush1.msra.mxu0 0.0
        %484 = vmatprep.subr.mxu0 0.0
        %485 = vmatpush1.msra.mxu0 0.0
        %486 = vmatprep.subr.mxu0 0.0
        %487 = vmatpush1.msra.mxu0 0.0
        %488 = vmatprep.subr.mxu0 0.0
        %489 = vmatpush1.msra.mxu0 0.0
        %490 = vmatprep.subr.mxu0 0.0
        %491 = vmatpush1.msra.mxu0 0.0
        %492 = vmatprep.subr.mxu0 0.0
        %493 = vmatpush1.msra.mxu0 0.0
        %494 = vmatprep.subr.mxu0 0.0
        %495 = vmatpush1.msra.mxu0 0.0
        %496 = vmatprep.subr.mxu0 0.0
        %497 = vmatpush1.msra.mxu0 0.0
        %498 = vmatprep.subr.mxu0 0.0
        %499 = vmatpush1.msra.mxu0 0.0
        %500 = vmatprep.subr.mxu0 0.0
        %501 = vmatpush1.msra.mxu0 0.0
        %502 = vmatprep.subr.mxu0 0.0
        %503 = vmatpush1.msra.mxu0 0.0
        %504 = vmatprep.subr.mxu0 0.0
        %505 = vmatpush1.msra.mxu0 0.0
        %506 = vmatprep.subr.mxu0 0.0
        %507 = vmatpush1.msra.mxu0 0.0
        %508 = vmatprep.subr.mxu0 0.0
        %509 = vmatpush1.msra.mxu0 0.0
        %510 = vmatprep.mubr.f32.mxu0 0.0
        %511 = vmatmul.mubr.f32.gmra.mrb[0].mxu0 %v440
        %v512 = vpop.f32.mrb[0].mxu0
        %v513 = vadd.f32 %v436, %v512
        %v514 = vpop.f32.mrb[0].mxu0
        %515 = vdwg.mxu0
        %v516 = vld [vmem:[%s3] sm:$0xff]
        %v517 = vld [vmem:[%s3 + $0x8] sm:$0xff]
        %v518 = vld [vmem:[%s4] sm:$0xff]
        %v519 = vld [vmem:[%s4 + $0x8] sm:$0xff]
        %521 = vset.pattern.permute.xlu0 0
        %522 = vperm.xlu0 %521, %v518
        %v523 = vpop.permute.xlu0 %522
        %526 = vset.pattern.permute.xlu0 0
        %527 = vperm.xlu0 %526, %v519
        %v528 = vpop.permute.xlu0 %527
        %vm530 = vcmask 64512
        %v532 = vsel %vm530, %v516, 0
        %v535 = vsel %vm530, %v517, 0
        %537 = vmatprep.subr.mxu0 0.0
        %538 = vmatpush1.msra.mxu0 %v513
        %539 = vmatprep.subr.mxu0 0.0
        %540 = vmatpush1.msra.mxu0 0.0
        %541 = vmatprep.subr.mxu0 0.0
        %542 = vmatpush1.msra.mxu0 0.0
        %543 = vmatprep.subr.mxu0 0.0
        %544 = vmatpush1.msra.mxu0 0.0
        %545 = vmatprep.subr.mxu0 0.0
        %546 = vmatpush1.msra.mxu0 0.0
        %547 = vmatprep.subr.mxu0 0.0
        %548 = vmatpush1.msra.mxu0 0.0
        %549 = vmatprep.subr.mxu0 0.0
        %550 = vmatpush1.msra.mxu0 0.0
        %551 = vmatprep.subr.mxu0 0.0
        %552 = vmatpush1.msra.mxu0 0.0
        %553 = vmatprep.subr.mxu0 0.0
        %554 = vmatpush1.msra.mxu0 0.0
        %555 = vmatprep.subr.mxu0 0.0
        %556 = vmatpush1.msra.mxu0 0.0
        %557 = vmatprep.subr.mxu0 0.0
        %558 = vmatpush1.msra.mxu0 0.0
        %559 = vmatprep.subr.mxu0 0.0
        %560 = vmatpush1.msra.mxu0 0.0
        %561 = vmatprep.subr.mxu0 0.0
        %562 = vmatpush1.msra.mxu0 0.0
        %563 = vmatprep.subr.mxu0 0.0
        %564 = vmatpush1.msra.mxu0 0.0
        %565 = vmatprep.subr.mxu0 0.0
        %566 = vmatpush1.msra.mxu0 0.0
        %567 = vmatprep.subr.mxu0 0.0
        %568 = vmatpush1.msra.mxu0 0.0
        %569 = vmatprep.subr.mxu0 0.0
        %570 = vmatpush1.msra.mxu0 0.0
        %571 = vmatprep.subr.mxu0 0.0
        %572 = vmatpush1.msra.mxu0 0.0
        %573 = vmatprep.subr.mxu0 0.0
        %574 = vmatpush1.msra.mxu0 0.0
        %575 = vmatprep.subr.mxu0 0.0
        %576 = vmatpush1.msra.mxu0 0.0
        %577 = vmatprep.subr.mxu0 0.0
        %578 = vmatpush1.msra.mxu0 0.0
        %579 = vmatprep.subr.mxu0 0.0
        %580 = vmatpush1.msra.mxu0 0.0
        %581 = vmatprep.subr.mxu0 0.0
        %582 = vmatpush1.msra.mxu0 0.0
        %583 = vmatprep.subr.mxu0 0.0
        %584 = vmatpush1.msra.mxu0 0.0
        %585 = vmatprep.subr.mxu0 0.0
        %586 = vmatpush1.msra.mxu0 0.0
        %587 = vmatprep.subr.mxu0 0.0
        %588 = vmatpush1.msra.mxu0 0.0
        %589 = vmatprep.subr.mxu0 0.0
        %590 = vmatpush1.msra.mxu0 0.0
        %591 = vmatprep.subr.mxu0 0.0
        %592 = vmatpush1.msra.mxu0 0.0
        %593 = vmatprep.subr.mxu0 0.0
        %594 = vmatpush1.msra.mxu0 0.0
        %595 = vmatprep.subr.mxu0 0.0
        %596 = vmatpush1.msra.mxu0 0.0
        %597 = vmatprep.subr.mxu0 0.0
        %598 = vmatpush1.msra.mxu0 0.0
        %599 = vmatprep.subr.mxu0 0.0
        %600 = vmatpush1.msra.mxu0 0.0
        %601 = vmatprep.mubr.f32.mxu0 0.0
        %602 = vmatmul.mubr.f32.gmra.mrb[0].mxu0 %v532
        %v603 = vpop.f32.mrb[0].mxu0
        %v604 = vadd.f32 %v523, %v603
        %v605 = vpop.f32.mrb[0].mxu0
        %606 = vmatprep.mubr.f32.mxu0 0.0
        %607 = vmatmul.mubr.f32.gmra.mrb[0].mxu0 %v535
        %v608 = vpop.f32.mrb[0].mxu0
        %v609 = vadd.f32 %v528, %v608
        %v610 = vpop.f32.mrb[0].mxu0
        %611 = vdwg.mxu0
        %v612 = vld [vmem:[%s5] sm:$0x1f]
        %v613 = vld [vmem:[%s6] sm:$0x1f]
        %615 = vset.pattern.permute.xlu0 0
        %616 = vperm.xlu0 %615, %v613
        %v617 = vpop.permute.xlu0 %616
        %vm619 = vcmask 130048
        %v621 = vsel %vm619, %v612, 0
        %623 = vmatprep.subr.mxu0 0.0
        %624 = vmatpush1.msra.mxu0 %v604
        %625 = vmatprep.subr.mxu0 0.0
        %626 = vmatpush1.msra.mxu0 %v609
        %627 = vmatprep.subr.mxu0 0.0
        %628 = vmatpush1.msra.mxu0 0.0
        %629 = vmatprep.subr.mxu0 0.0
        %630 = vmatpush1.msra.mxu0 0.0
        %631 = vmatprep.subr.mxu0 0.0
        %632 = vmatpush1.msra.mxu0 0.0
        %633 = vmatprep.subr.mxu0 0.0
        %634 = vmatpush1.msra.mxu0 0.0
        %635 = vmatprep.subr.mxu0 0.0
        %636 = vmatpush1.msra.mxu0 0.0
        %637 = vmatprep.subr.mxu0 0.0
        %638 = vmatpush1.msra.mxu0 0.0
        %639 = vmatprep.subr.mxu0 0.0
        %640 = vmatpush1.msra.mxu0 0.0
        %641 = vmatprep.subr.mxu0 0.0
        %642 = vmatpush1.msra.mxu0 0.0
        %643 = vmatprep.subr.mxu0 0.0
        %644 = vmatpush1.msra.mxu0 0.0
        %645 = vmatprep.subr.mxu0 0.0
        %646 = vmatpush1.msra.mxu0 0.0
        %647 = vmatprep.subr.mxu0 0.0
        %648 = vmatpush1.msra.mxu0 0.0
        %649 = vmatprep.subr.mxu0 0.0
        %650 = vmatpush1.msra.mxu0 0.0
        %651 = vmatprep.subr.mxu0 0.0
        %652 = vmatpush1.msra.mxu0 0.0
        %653 = vmatprep.subr.mxu0 0.0
        %654 = vmatpush1.msra.mxu0 0.0
        %655 = vmatprep.subr.mxu0 0.0
        %656 = vmatpush1.msra.mxu0 0.0
        %657 = vmatprep.subr.mxu0 0.0
        %658 = vmatpush1.msra.mxu0 0.0
        %659 = vmatprep.subr.mxu0 0.0
        %660 = vmatpush1.msra.mxu0 0.0
        %661 = vmatprep.subr.mxu0 0.0
        %662 = vmatpush1.msra.mxu0 0.0
        %663 = vmatprep.subr.mxu0 0.0
        %664 = vmatpush1.msra.mxu0 0.0
        %665 = vmatprep.subr.mxu0 0.0
        %666 = vmatpush1.msra.mxu0 0.0
        %667 = vmatprep.subr.mxu0 0.0
        %668 = vmatpush1.msra.mxu0 0.0
        %669 = vmatprep.subr.mxu0 0.0
        %670 = vmatpush1.msra.mxu0 0.0
        %671 = vmatprep.subr.mxu0 0.0
        %672 = vmatpush1.msra.mxu0 0.0
        %673 = vmatprep.subr.mxu0 0.0
        %674 = vmatpush1.msra.mxu0 0.0
        %675 = vmatprep.subr.mxu0 0.0
        %676 = vmatpush1.msra.mxu0 0.0
        %677 = vmatprep.subr.mxu0 0.0
        %678 = vmatpush1.msra.mxu0 0.0
        %679 = vmatprep.subr.mxu0 0.0
        %680 = vmatpush1.msra.mxu0 0.0
        %681 = vmatprep.subr.mxu0 0.0
        %682 = vmatpush1.msra.mxu0 0.0
        %683 = vmatprep.subr.mxu0 0.0
        %684 = vmatpush1.msra.mxu0 0.0
        %685 = vmatprep.subr.mxu0 0.0
        %686 = vmatpush1.msra.mxu0 0.0
        %687 = vmatprep.mubr.f32.mxu0 0.0
        %688 = vmatmul.mubr.f32.gmra.mrb[0].mxu0 %v621
        %v689 = vpop.f32.mrb[0].mxu0
        %v690 = vadd.f32 %v617, %v689
        %v691 = vpop.f32.mrb[0].mxu0
        %692 = vdwg.mxu0
        %vm693 = vcmask 520192
        %694 = vst.msk [vmem:[%s429] sm:$0x1f] %vm693, %v690
        %v695 = vld [vmem:[#allocation2] sm:$0xff]
        %v696 = vld [vmem:[#allocation2 + $0x8] sm:$0xff]
        %v697 = vld [vmem:[#allocation2 + $0x10] sm:$0xff]
        %v698 = vld [vmem:[#allocation2 + $0x18] sm:$0xff]
        %v699 = vld [vmem:[#allocation2 + $0x20] sm:$0xff]
        %v700 = vld [vmem:[#allocation2 + $0x28] sm:$0xff]
        %v701 = vld [vmem:[#allocation2 + $0x30] sm:$0xff]
        %v702 = vld [vmem:[#allocation2 + $0x38] sm:$0xff]
        %v703 = vld [vmem:[#allocation2 + $0x40] sm:$0xff]
        %v704 = vld [vmem:[#allocation2 + $0x48] sm:$0xff]
        %v705 = vld [vmem:[#allocation2 + $0x50] sm:$0xff]
        %v706 = vld [vmem:[#allocation2 + $0x58] sm:$0xff]
        %v707 = vld [vmem:[#allocation2 + $0x60] sm:$0xff]
        %v708 = vld [vmem:[#allocation2 + $0x68] sm:$0xff]
        %v709 = vld [vmem:[#allocation2 + $0x70] sm:$0xff]
        %v710 = vld [vmem:[#allocation2 + $0x78] sm:$0xff]
        %vm711 = vcmask 523264
        %v713 = vsel %vm711, %v690, 0
        %715 = vmatprep.subr.mxu0 %v696
        %716 = vmatpush1.msra.mxu0 %v695
        %717 = vmatprep.subr.mxu0 %v698
        %718 = vmatpush1.msra.mxu0 %v697
        %719 = vmatprep.subr.mxu0 %v700
        %720 = vmatpush1.msra.mxu0 %v699
        %721 = vmatprep.subr.mxu0 %v702
        %722 = vmatpush1.msra.mxu0 %v701
        %723 = vmatprep.subr.mxu0 %v704
        %724 = vmatpush1.msra.mxu0 %v703
        %725 = vmatprep.subr.mxu0 %v706
        %726 = vmatpush1.msra.mxu0 %v705
        %727 = vmatprep.subr.mxu0 %v708
        %728 = vmatpush1.msra.mxu0 %v707
        %729 = vmatprep.subr.mxu0 %v710
        %730 = vmatpush1.msra.mxu0 %v709
        %731 = vmatprep.subr.mxu0 0.0
        %732 = vmatpush1.msra.mxu0 0.0
        %733 = vmatprep.subr.mxu0 0.0
        %734 = vmatpush1.msra.mxu0 0.0
        %735 = vmatprep.subr.mxu0 0.0
        %736 = vmatpush1.msra.mxu0 0.0
        %737 = vmatprep.subr.mxu0 0.0
        %738 = vmatpush1.msra.mxu0 0.0
        %739 = vmatprep.subr.mxu0 0.0
        %740 = vmatpush1.msra.mxu0 0.0
        %741 = vmatprep.subr.mxu0 0.0
        %742 = vmatpush1.msra.mxu0 0.0
        %743 = vmatprep.subr.mxu0 0.0
        %744 = vmatpush1.msra.mxu0 0.0
        %745 = vmatprep.subr.mxu0 0.0
        %746 = vmatpush1.msra.mxu0 0.0
        %747 = vmatprep.subr.mxu0 0.0
        %748 = vmatpush1.msra.mxu0 0.0
        %749 = vmatprep.subr.mxu0 0.0
        %750 = vmatpush1.msra.mxu0 0.0
        %751 = vmatprep.subr.mxu0 0.0
        %752 = vmatpush1.msra.mxu0 0.0
        %753 = vmatprep.subr.mxu0 0.0
        %754 = vmatpush1.msra.mxu0 0.0
        %755 = vmatprep.subr.mxu0 0.0
        %756 = vmatpush1.msra.mxu0 0.0
        %757 = vmatprep.subr.mxu0 0.0
        %758 = vmatpush1.msra.mxu0 0.0
        %759 = vmatprep.subr.mxu0 0.0
        %760 = vmatpush1.msra.mxu0 0.0
        %761 = vmatprep.subr.mxu0 0.0
        %762 = vmatpush1.msra.mxu0 0.0
        %763 = vmatprep.subr.mxu0 0.0
        %764 = vmatpush1.msra.mxu0 0.0
        %765 = vmatprep.subr.mxu0 0.0
        %766 = vmatpush1.msra.mxu0 0.0
        %767 = vmatprep.subr.mxu0 0.0
        %768 = vmatpush1.msra.mxu0 0.0
        %769 = vmatprep.subr.mxu0 0.0
        %770 = vmatpush1.msra.mxu0 0.0
        %771 = vmatprep.subr.mxu0 0.0
        %772 = vmatpush1.msra.mxu0 0.0
        %773 = vmatprep.subr.mxu0 0.0
        %774 = vmatpush1.msra.mxu0 0.0
        %775 = vmatprep.subr.mxu0 0.0
        %776 = vmatpush1.msra.mxu0 0.0
        %777 = vmatprep.subr.mxu0 0.0
        %778 = vmatpush1.msra.mxu0 0.0
        %779 = vmatprep.mubr.f32.mxu0 0.0
        %780 = vmatmul.mubr.f32.gmra.mrb[0].mxu0 %v713
        %v781 = vpop.f32.mrb[0].mxu0
        %v782 = vadd.f32 0.0, %v781
        %v783 = vpop.f32.mrb[0].mxu0
        %v784 = vadd.f32 0.0, %v783
        %785 = vdwg.mxu0
        %786 = vst [vmem:[%s425] sm:$0x1f] %v782
        %787 = vst [vmem:[%s425 + $0x8] sm:$0x1f] %v784
        %v788 = vmul.f32 %v513, %v513
        %v789 = vsel %vm711, %v788, 0.0
        %v790 = vrot.slane %v789, 4
        %v791 = vadd.f32 %v789, %v790
        %v792 = vrot.slane %v791, 2
        %v793 = vadd.f32 %v791, %v792
        %v794 = vrot.slane %v793, 1
        %v795 = vadd.f32 %v793, %v794
        %v796 = vmul.f32 %v795, %v795
        %vm797 = vcmask 516096
        %v798 = vsel %vm797, %v796, 0.0
        %799 = vadd.xlane.f32.xlu0 %v798
        %v800 = vpop.xlane.xlu0 %799
        %v801 = vrot.slane %v800, 4
        %v802 = vadd.f32 %v800, %v801
        %v803 = vrot.slane %v802, 2
        %v804 = vadd.f32 %v802, %v803
        %v805 = vrot.slane %v804, 1
        %v806 = vadd.f32 %v804, %v805
        %s807 = vtos %v806
        %v808 = vstv %s807
        %v809 = vrsqrt.pop %v808
        %s810 = vtos %v809
        %v811 = vstv %s810
        %v812 = vmul.f32 %v795, %v811
        %v813 = vmul.f32 %v513, %v812
        %814 = vst.msk [vmem:[%s403] sm:$0xff] %vm711, %v813
        %v815 = vmul.f32 %v604, %v604
        %v816 = vmul.f32 %v609, %v609
        %v817 = vsel %vm711, %v815, 0.0
        %v818 = vsel %vm711, %v816, 0.0
        %v819 = vadd.f32 %v817, %v818
        %v820 = vrot.slane %v819, 4
        %v821 = vadd.f32 %v819, %v820
        %v822 = vrot.slane %v821, 2
        %v823 = vadd.f32 %v821, %v822
        %v824 = vrot.slane %v823, 1
        %v825 = vadd.f32 %v823, %v824
        %v826 = vmul.f32 %v825, %v825
        %v827 = vsel %vm797, %v826, 0.0
        %828 = vadd.xlane.f32.xlu0 %v827
        %v829 = vpop.xlane.xlu0 %828
        %v830 = vrot.slane %v829, 4
        %v831 = vadd.f32 %v829, %v830
        %v832 = vrot.slane %v831, 2
        %v833 = vadd.f32 %v831, %v832
        %v834 = vrot.slane %v833, 1
        %v835 = vadd.f32 %v833, %v834
        %s836 = vtos %v835
        %v837 = vstv %s836
        %v838 = vrsqrt.pop %v837
        %s839 = vtos %v838
        %v840 = vstv %s839
        %v841 = vmul.f32 %v825, %v840
        %v842 = vmul.f32 %v604, %v841
        %v843 = vmul.f32 %v609, %v841
        %844 = vst.msk [vmem:[%s410] sm:$0xff] %vm711, %v842
        %845 = vst.msk [vmem:[%s410 + $0x8] sm:$0xff] %vm711, %v843
        %p846 = scmp.lt.s32.totalorder %s30, 1
        %s847 = scalar_select %p846, %s30, 1
        %s848 = smul.addr %s847, 2
        %s849 = smul.addr %s848, 8
        %s850 = scalar_lea.vmem %s8, %s849
        %s851 = sand.u32 %s237, 1
        %s852 = scalar_lea.sflag [#allocation4], %s851
        %s853 = sand.u32 %s237, 1
        %s854 = smul.addr %s853, 8
        %s855 = scalar_lea.vmem [#allocation5], %s854
        %s856 = sand.u32 %s263, 1
        %s857 = scalar_lea.sflag [#allocation7], %s856
        %s858 = sand.u32 %s263, 1
        %s859 = smul.addr %s858, 16
        %s860 = scalar_lea.vmem [#allocation6], %s859
        %p861 = scmp.lt.s32.totalorder %s30, 1
        %s862 = scalar_select %p861, %s30, 1
        %s863 = smul.addr %s862, 8
        %s864 = scalar_lea.vmem %s11, %s863
        // Predicated region
        $region57: #{tpu_custom_call.1} parent=51 // pred_check
          %p865 = pneg %p221
        $region58: #{tpu_custom_call.1} parent=51 // pred_check_branch
          %867 = sbr.rel (%p865) target = $region60
        $region59: #{tpu_custom_call.1} parent=51 // pred_region
          _
        $region60: #{tpu_custom_call.1} parent=51 // pred_fallthru
          _
        // Predicated region
        $region61: #{tpu_custom_call.1} parent=51 // pred_check
          %p868 = pneg %p247
        $region62: #{tpu_custom_call.1} parent=51 // pred_check_branch
          %870 = sbr.rel (%p868) target = $region64
        $region63: #{tpu_custom_call.1} parent=51 // pred_region
          %s872 = ssub.s32 128, 128
          %873 = vsyncadd %s852, %s872
          %s874 = smul.addr %s30, 128
          %s875 = scalar_lea.hbm %s9, %s874
          %s877 = sshll.u32 %s855, 4
          %s878 = int_to_ptr.vmem [resolvable:$true] %s877
          %880 = dma.vmem_to_hbm [thread:$0]  %s878, 128, %s875, %s852
        $region64: #{tpu_custom_call.1} parent=51 // pred_fallthru
          _
        // Predicated region
        $region65: #{tpu_custom_call.1} parent=51 // pred_check
          %p881 = pneg %p273
        $region66: #{tpu_custom_call.1} parent=51 // pred_check_branch
          %883 = sbr.rel (%p881) target = $region68
        $region67: #{tpu_custom_call.1} parent=51 // pred_region
          %s885 = ssub.s32 256, 256
          %886 = vsyncadd %s857, %s885
          %s887 = smul.addr %s30, 2
          %s888 = smul.addr %s887, 128
          %s889 = scalar_lea.hbm %s10, %s888
          %s890 = sshll.u32 %s860, 4
          %s891 = int_to_ptr.vmem [resolvable:$true] %s890
          %896 = dma.vmem_to_hbm [thread:$0]  %s891, 256, %s889, %s857, 128, 128, 8
        $region68: #{tpu_custom_call.1} parent=51 // pred_fallthru
          _
        // Predicated region
        $region69: #{tpu_custom_call.1} parent=51 // pred_check
          %p897 = pneg %p299
        $region70: #{tpu_custom_call.1} parent=51 // pred_check_branch
          %899 = sbr.rel (%p897) target = $region72
        $region71: #{tpu_custom_call.1} parent=51 // pred_region
          _
        $region72: #{tpu_custom_call.1} parent=51 // pred_fallthru
          _
      $region52: #{tpu_custom_call.1} parent=5 // pred_fallthru
        _
      %p900 = scmp.le.s32.totalorder 2, %s25
      // Predicated region
      $region73: #{tpu_custom_call.1} parent=5 // pred_check
        %p901 = pneg %p900
      $region74: #{tpu_custom_call.1} parent=5 // pred_check_branch
        %903 = sbr.rel (%p901) target = $region76
      $region75: #{tpu_custom_call.1} parent=5 // pred_region
        %s904 = ssub.s32 %s25, 2
        // Predicated region
        $region77: #{tpu_custom_call.1} parent=75 // pred_check
          %p905 = pneg %p227
        $region78: #{tpu_custom_call.1} parent=75 // pred_check_branch
          %907 = sbr.rel (%p905) target = $region80
        $region79: #{tpu_custom_call.1} parent=75 // pred_region
          %p908 = scmp.lt.s32.totalorder %s31, 1
          %s909 = scalar_select %p908, %s31, 1
          %s910 = smul.addr %s909, 2
          %s911 = smul.addr %s910, 8
          %s912 = scalar_lea.vmem %s8, %s911
        $region80: #{tpu_custom_call.1} parent=75 // pred_fallthru
          _
        // Predicated region
        $region81: #{tpu_custom_call.1} parent=75 // pred_check
          %p913 = pneg %p253
        $region82: #{tpu_custom_call.1} parent=75 // pred_check_branch
          %915 = sbr.rel (%p913) target = $region84
        $region83: #{tpu_custom_call.1} parent=75 // pred_region
          %s916 = sand.u32 %s238, 1
          %s917 = scalar_lea.sflag [#allocation4], %s916
          %s918 = sand.u32 %s238, 1
          %s919 = smul.addr %s918, 8
          %s920 = scalar_lea.vmem [#allocation5], %s919
          %921 = dma.done %s917, 128
        $region84: #{tpu_custom_call.1} parent=75 // pred_fallthru
          _
        // Predicated region
        $region85: #{tpu_custom_call.1} parent=75 // pred_check
          %p922 = pneg %p279
        $region86: #{tpu_custom_call.1} parent=75 // pred_check_branch
          %924 = sbr.rel (%p922) target = $region88
        $region87: #{tpu_custom_call.1} parent=75 // pred_region
          %s925 = sand.u32 %s264, 1
          %s926 = scalar_lea.sflag [#allocation7], %s925
          %s927 = sand.u32 %s264, 1
          %s928 = smul.addr %s927, 16
          %s929 = scalar_lea.vmem [#allocation6], %s928
          %930 = dma.done %s926, 256
        $region88: #{tpu_custom_call.1} parent=75 // pred_fallthru
          _
        // Predicated region
        $region89: #{tpu_custom_call.1} parent=75 // pred_check
          %p931 = pneg %p305
        $region90: #{tpu_custom_call.1} parent=75 // pred_check_branch
          %933 = sbr.rel (%p931) target = $region92
        $region91: #{tpu_custom_call.1} parent=75 // pred_region
          %p934 = scmp.lt.s32.totalorder %s31, 1
          %s935 = scalar_select %p934, %s31, 1
          %s936 = smul.addr %s935, 8
          %s937 = scalar_lea.vmem %s11, %s936
        $region92: #{tpu_custom_call.1} parent=75 // pred_fallthru
          _
      $region76: #{tpu_custom_call.1} parent=5 // pred_fallthru
        _
    $region6: #{tpu_custom_call.1} parent=1 // loop_footer
      %s29 = sadd.s32 1, %s25
    $region7: #{tpu_custom_call.1} parent=1 // loop_footer_branch
      %24 = sbr.rel target = $region3
    $region8: #{tpu_custom_call.1} parent=1 // loop_exit
      _
    %938 = vsyncpa [#allocation3], 1
    %s939 = scalar_lea.sflag [#allocation3], 1
    %940 = vsyncpa %s939, 1
    %941 = vsyncpa [#allocation4], 1
    %s942 = scalar_lea.sflag [#allocation4], 1
    %943 = vsyncpa %s942, 1
    %944 = vsyncpa [#allocation7], 1
    %s945 = scalar_lea.sflag [#allocation7], 1
    %946 = vsyncpa %s945, 1

</llo_original>
